<compile_context>
chip_gen: v7x
topology: tpu7x:2x2x1
jax: 0.10.0
libtpu: 0.0.40
codegen_flags: <defaults>
</compile_context>

<pallas_src>
import functools

import jax
import jax.numpy as jnp
from jax.experimental import pallas as pl
from jax.experimental.pallas import tpu as pltpu


_NEG_INF = -1e30


def _round_up(x, m):
    return ((x + m - 1) // m) * m


# ----------------------------------------------------------------------------
# Kernel variant 1: whole K/V fits in a single kv tile (nk == 1).
# Plain row softmax, no online-softmax state.
# ----------------------------------------------------------------------------
def _sdpa_single_kernel(scale_ref, q_ref, k_ref, v_ref, *rest,
                        has_scale, needs_mask, use_dropout, dropout_p,
                        compute_dtype):
    i = 0
    bias_ref = None
    keep_ref = None
    if needs_mask:
        bias_ref = rest[i]; i += 1
    if use_dropout:
        keep_ref = rest[i]; i += 1
    o_ref = rest[i]

    q = q_ref[...]
    if has_scale:
        q = q * scale_ref[0]
    q = q.astype(compute_dtype)
    k = k_ref[...].astype(compute_dtype)

    # q @ k^T without materializing k.T (contract last dims). bf16 MXU, f32 acc.
    s = jax.lax.dot_general(q, k, (((1,), (1,)), ((), ())),
                            preferred_element_type=jnp.float32)   # (tq, tk)
    if needs_mask:
        s = s + bias_ref[...]                                      # 0 / -1e30

    m = jnp.max(s, axis=-1, keepdims=True)
    p = jnp.exp(s - m)
    l = jnp.sum(p, axis=-1, keepdims=True)

    if use_dropout:
        p = p * keep_ref[...]            # keep in {0,1}; 1/(1-p) in finalize

    acc = jax.lax.dot_general(p.astype(compute_dtype),
                              v_ref[...].astype(compute_dtype),
                              (((1,), (0,)), ((), ())),
                              preferred_element_type=jnp.float32)

    inv_l = pl.reciprocal(l, approx=True)     # EUP vrcp (free slot)
    inv_l = inv_l * (2.0 - l * inv_l)         # one Newton step -> f32 accuracy
    if use_dropout:
        inv_l = inv_l * (1.0 / (1.0 - dropout_p))
    o_ref[...] = (acc * inv_l).astype(o_ref.dtype)


# ----------------------------------------------------------------------------
# Kernel variant 2: flash-attention style online softmax over kv tiles.
# ----------------------------------------------------------------------------
def _sdpa_flash_kernel(scale_ref, q_ref, k_ref, v_ref, *rest,
                       has_scale, needs_mask, use_dropout, dropout_p,
                       compute_dtype):
    i = 0
    bias_ref = None
    keep_ref = None
    if needs_mask:
        bias_ref = rest[i]; i += 1
    if use_dropout:
        keep_ref = rest[i]; i += 1
    o_ref = rest[i]; i += 1
    m_sc, l_sc, acc_sc, qs_sc = rest[i:i + 4]

    kv = pl.program_id(2)
    kv_last = pl.num_programs(2) - 1

    @pl.when(kv == 0)
    def _():
        m_sc[...] = jnp.full_like(m_sc, _NEG_INF)
        l_sc[...] = jnp.zeros_like(l_sc)
        acc_sc[...] = jnp.zeros_like(acc_sc)
        q = q_ref[...]
        if has_scale:
            q = q * scale_ref[0]           # fold 1/scale into q ONCE per (b,qi)
        qs_sc[...] = q.astype(qs_sc.dtype)

    k = k_ref[...].astype(compute_dtype)
    s = jax.lax.dot_general(qs_sc[...], k, (((1,), (1,)), ((), ())),
                            preferred_element_type=jnp.float32)   # (tq, tk)
    if needs_mask:
        s = s + bias_ref[...]              # 0 on interior tiles, -1e30 on pad

    m_prev = m_sc[...]
    m_new = jnp.maximum(m_prev, jnp.max(s, axis=-1, keepdims=True))
    alpha = jnp.exp(m_prev - m_new)
    p = jnp.exp(s - m_new)                 # padded cols underflow to exact 0

    l_sc[...] = alpha * l_sc[...] + jnp.sum(p, axis=-1, keepdims=True)
    m_sc[...] = m_new

    # Dropout applies (in PyTorch) to the normalized softmax before @ v.
    # Equivalent: drop p in the accumulator but NOT in l; rescale at finalize.
    if use_dropout:
        p = p * keep_ref[...]

    acc_sc[...] = alpha * acc_sc[...] + jax.lax.dot_general(
        p.astype(compute_dtype), v_ref[...].astype(compute_dtype),
        (((1,), (0,)), ((), ())), preferred_element_type=jnp.float32)

    @pl.when(kv == kv_last)
    def _():
        l = l_sc[...]
        inv_l = pl.reciprocal(l, approx=True)
        inv_l = inv_l * (2.0 - l * inv_l)
        if use_dropout:
            inv_l = inv_l * (1.0 / (1.0 - dropout_p))
        o_ref[...] = (acc_sc[...] * inv_l).astype(o_ref.dtype)


# ----------------------------------------------------------------------------
# Wrapper
# ----------------------------------------------------------------------------
def sdpa_pallas(q, k, v, scale_factor=None, dropout_p=0.1, training=False,
                rng_key=None, compute_dtype=jnp.bfloat16):
    """Forward pass of the PyTorch Model (dropout active only if training)."""
    B, Lq, D = q.shape
    Bk, Lk, Dk = k.shape
    assert B == Bk and D == Dk and v.shape == (B, Lk, D)

    # --- TPU-friendly, lane-dense tiles --------------------------------------
    d_pad = _round_up(D, 128)                    # lane-dense last dim
    tq = min(_round_up(Lq, 8), 512)              # sublane-aligned query tile
    tk = min(_round_up(Lk, 128), 512)            # 128-aligned key tile (MXU)
    lq_pad = _round_up(Lq, tq)
    lk_pad = _round_up(Lk, tk)
    nq = lq_pad // tq
    nk = lk_pad // tk
    # TODO(synk): for v7x (2 TCs) with B*nq == 1 a split-kv variant with a
    # combine step would keep the second TensorCore busy; not implemented.

    qp = jnp.pad(q, ((0, 0), (0, lq_pad - Lq), (0, d_pad - D)))
    kp = jnp.pad(k, ((0, 0), (0, lk_pad - Lk), (0, d_pad - D)))
    vp = jnp.pad(v, ((0, 0), (0, lk_pad - Lk), (0, d_pad - D)))

    has_scale = scale_factor is not None
    needs_mask = lk_pad != Lk
    use_dropout = bool(training) and float(dropout_p) > 0.0
    single_kv = nk == 1

    inv_scale = jnp.array(
        [1.0 / float(scale_factor) if has_scale else 1.0], dtype=jnp.float32)

    # --- build input list / specs (optional bias + dropout-keep mask) --------
    if single_kv:
        grid = (B, nq)
        q_map = lambda b, qi: (b, qi, 0)
        k_map = lambda b, qi: (b, 0, 0)
        bias_map = lambda b, qi: (0, 0)
        keep_map = lambda b, qi: (b, qi, 0)
        semantics = ("parallel", "parallel")
        kernel_fn = _sdpa_single_kernel
        scratch_shapes = []
    else:
        grid = (B, nq, nk)
        q_map = lambda b, qi, kv: (b, qi, 0)
        k_map = lambda b, qi, kv: (b, kv, 0)
        bias_map = lambda b, qi, kv: (0, kv)
        keep_map = lambda b, qi, kv: (b, qi, kv)
        semantics = ("parallel", "parallel", "arbitrary")
        kernel_fn = _sdpa_flash_kernel
        scratch_shapes = [
            pltpu.VMEM((tq, 1), jnp.float32),          # running max m
            pltpu.VMEM((tq, 1), jnp.float32),          # running denom l
            pltpu.VMEM((tq, d_pad), jnp.float32),      # running p @ v acc
            pltpu.VMEM((tq, d_pad), compute_dtype),    # scaled/cast q
        ]

    inputs = [inv_scale, qp, kp, vp]
    in_specs = [
        pl.BlockSpec(memory_space=pltpu.MemorySpace.SMEM),            # 1/scale
        pl.BlockSpec((None, tq, d_pad), q_map),                        # q
        pl.BlockSpec((None, tk, d_pad), k_map),                        # k
        pl.BlockSpec((None, tk, d_pad), k_map),                        # v
    ]

    if needs_mask:
        bias = jnp.where(jnp.arange(lk_pad) < Lk, 0.0, _NEG_INF)
        bias = bias.astype(jnp.float32)[None, :]                       # (1, lk_pad)
        inputs.append(bias)
        in_specs.append(pl.BlockSpec((1, tk), bias_map))

    if use_dropout:
        # TODO(synk): exact PyTorch RNG parity for dropout is not reproducible;
        # the keep mask is generated host-side with jax.random (works on both
        # real TPU and CPU interpret mode, unlike the in-kernel TPU PRNG).
        if rng_key is None:
            rng_key = jax.random.PRNGKey(0)
        keep = jax.random.bernoulli(
            rng_key, 1.0 - float(dropout_p), (B, lq_pad, lk_pad))
        inputs.append(keep.astype(jnp.float32))
        in_specs.append(pl.BlockSpec((None, tq, tk), keep_map))

    kernel = functools.partial(
        kernel_fn,
        has_scale=has_scale,
        needs_mask=needs_mask,
        use_dropout=use_dropout,
        dropout_p=float(dropout_p),
        compute_dtype=compute_dtype,
    )

    out_pad = pl.pallas_call(
        kernel,
        out_shape=jax.ShapeDtypeStruct((B, lq_pad, d_pad), q.dtype),
        grid=grid,
        in_specs=in_specs,
        out_specs=pl.BlockSpec((None, tq, d_pad), q_map),
        scratch_shapes=scratch_shapes,
        compiler_params=pltpu.CompilerParams(
            dimension_semantics=semantics,
            vmem_limit_bytes=32 * 1024 * 1024,
        ),
    )(*inputs)

    return out_pad[:, :Lq, :D]


def sdpa_ref(q, k, v, scale_factor=None):
    s = jnp.einsum("bqd,bkd->bqk", q, k)
    if scale_factor is not None:
        s = s / scale_factor
    p = jax.nn.softmax(s, axis=-1)
    return jnp.einsum("bqk,bkd->bqd", p, v)


if __name__ == "__main__":
    key = jax.random.PRNGKey(0)
    kq, kk_, kv_ = jax.random.split(key, 3)

    # Shapes from the module's globals: q (1,5,2), k (1,6,2), v (1,6,2)
    q = jax.random.normal(kq, (1, 5, 2), dtype=jnp.float32)
    k = jax.random.normal(kk_, (1, 6, 2), dtype=jnp.float32)
    v = jax.random.normal(kv_, (1, 6, 2), dtype=jnp.float32)

    # Eval mode, f32 compute path: tight check against reference.
    out = jax.block_until_ready(
        sdpa_pallas(q, k, v, scale_factor=None, training=False,
                    compute_dtype=jnp.float32))
    ref = sdpa_ref(q, k, v, None)
    assert out.shape == (1, 5, 2)
    assert jnp.allclose(out, ref, atol=1e-5, rtol=1e-5), (out, ref)

    # Eval mode with explicit scale, default bf16 MXU path (looser tolerance).
    out_s = jax.block_until_ready(
        sdpa_pallas(q, k, v, scale_factor=1.3, training=False))
    ref_s = sdpa_ref(q, k, v, 1.3)
    assert jnp.allclose(out_s, ref_s, atol=5e-2, rtol=5e-2), (out_s, ref_s)

    # Multi-kv-tile flash path with key-padding mask (Lk=640 -> nk=2).
    kq2, kk2, kv2 = jax.random.split(jax.random.PRNGKey(1), 3)
    q2 = jax.random.normal(kq2, (2, 100, 64), dtype=jnp.float32)
    k2 = jax.random.normal(kk2, (2, 640, 64), dtype=jnp.float32)
    v2 = jax.random.normal(kv2, (2, 640, 64), dtype=jnp.float32)
    ref2 = sdpa_ref(q2, k2, v2, 8.0)
    out2 = jax.block_until_ready(
        sdpa_pallas(q2, k2, v2, scale_factor=8.0, training=False,
                    compute_dtype=jnp.float32))
    assert jnp.allclose(out2, ref2, atol=1e-4, rtol=1e-4)
    out2b = jax.block_until_ready(
        sdpa_pallas(q2, k2, v2, scale_factor=8.0, training=False))
    assert jnp.allclose(out2b, ref2, atol=5e-2, rtol=5e-2)

    # Training-mode dropout (host-generated keep mask; stochastic -> sanity).
    out_d = jax.block_until_ready(
        sdpa_pallas(q, k, v, scale_factor=None, dropout_p=0.1, training=True,
                    rng_key=jax.random.PRNGKey(42)))
    assert out_d.shape == (1, 5, 2)
    assert bool(jnp.all(jnp.isfinite(out_d)))

    # Training-mode dropout on the flash (multi-tile) path.
    out_d2 = jax.block_until_ready(
        sdpa_pallas(q2, k2, v2, scale_factor=8.0, dropout_p=0.1, training=True,
                    rng_key=jax.random.PRNGKey(7)))
    assert out_d2.shape == (2, 100, 64)
    assert bool(jnp.all(jnp.isfinite(out_d2)))

    print("KERNEL_OK")
</pallas_src>

<mosaic_0001>
module attributes {stable_mosaic.version = 11 : i64} {
  func.func @_sdpa_single_kernel(%arg0: i32, %arg1: i32, %arg2: memref<1xf32, #tpu.memory_space<smem>>, %arg3: memref<1x8x128xf32, #tpu.memory_space<vmem>>, %arg4: memref<1x128x128xf32, #tpu.memory_space<vmem>>, %arg5: memref<1x128x128xf32, #tpu.memory_space<vmem>>, %arg6: memref<1x128xf32, #tpu.memory_space<vmem>>, %arg7: memref<1x8x128xf32, #tpu.memory_space<vmem>>) attributes {dimension_semantics = [#tpu.dimension_semantics<parallel>, #tpu.dimension_semantics<parallel>], iteration_bounds = array<i64: 1, 1>, scalar_prefetch = 0 : i64, scratch_operands = 0 : i64, tpu.core_type = #tpu.core_type<tc>, window_params = [{transform_indices = @transform_0, window_bounds = array<i64: 1>}, {transform_indices = @transform_1, window_bounds = array<i64: 1, 8, 128>}, {transform_indices = @transform_2, window_bounds = array<i64: 1, 128, 128>}, {transform_indices = @transform_3, window_bounds = array<i64: 1, 128, 128>}, {pipeline_mode = #tpu.pipeline_mode<synchronous>, transform_indices = @transform_4, window_bounds = array<i64: 1, 128>}, {transform_indices = @transform_5, window_bounds = array<i64: 1, 8, 128>}]} {
    %c0 = arith.constant 0 : index
    %c0_0 = arith.constant 0 : index
    %c0_1 = arith.constant 0 : index
    %0 = vector.load %arg3[%c0, %c0_0, %c0_1] : memref<1x8x128xf32, #tpu.memory_space<vmem>>, vector<1x8x128xf32>
    %1 = vector.shape_cast %0 : vector<1x8x128xf32> to vector<8x128xf32>
    %c0_2 = arith.constant 0 : index
    %c0_3 = arith.constant 0 : index
    %c0_4 = arith.constant 0 : index
    %2 = vector.load %arg4[%c0_2, %c0_3, %c0_4] : memref<1x128x128xf32, #tpu.memory_space<vmem>>, vector<1x128x128xf32>
    %3 = vector.shape_cast %2 : vector<1x128x128xf32> to vector<128x128xf32>
    %cst = arith.constant dense<0.000000e+00> : vector<8x128xf32>
    %4 = tpu.matmul %1, %3, %cst {dimension_numbers = #tpu.dot_dimension_numbers<[1], [1], [0], [0], [0, 0, 1, 0], [], []>} : vector<8x128xf32>, vector<128x128xf32>, vector<8x128xf32> -> vector<8x128xf32>
    %c0_5 = arith.constant 0 : index
    %c0_6 = arith.constant 0 : index
    %5 = vector.load %arg6[%c0_5, %c0_6] : memref<1x128xf32, #tpu.memory_space<vmem>>, vector<1x128xf32>
    %6 = vector.broadcast %5 : vector<1x128xf32> to vector<8x128xf32>
    %7 = arith.addf %4, %6 : vector<8x128xf32>
    %cst_7 = arith.constant dense<0xFF800000> : vector<8xf32>
    %8 = vector.multi_reduction <maximumf>, %7, %cst_7 [1] : vector<8x128xf32> to vector<8xf32>
    %9 = vector.shape_cast %8 : vector<8xf32> to vector<8x1xf32>
    %10 = vector.broadcast %9 : vector<8x1xf32> to vector<8x128xf32>
    %11 = arith.subf %7, %10 : vector<8x128xf32>
    %12 = math.exp %11 : vector<8x128xf32>
    %cst_8 = arith.constant dense<0.000000e+00> : vector<8xf32>
    %13 = vector.multi_reduction <add>, %12, %cst_8 [1] : vector<8x128xf32> to vector<8xf32>
    %14 = vector.shape_cast %13 : vector<8xf32> to vector<8x1xf32>
    %c0_9 = arith.constant 0 : index
    %c0_10 = arith.constant 0 : index
    %c0_11 = arith.constant 0 : index
    %15 = vector.load %arg5[%c0_9, %c0_10, %c0_11] : memref<1x128x128xf32, #tpu.memory_space<vmem>>, vector<1x128x128xf32>
    %16 = vector.shape_cast %15 : vector<1x128x128xf32> to vector<128x128xf32>
    %cst_12 = arith.constant dense<0.000000e+00> : vector<8x128xf32>
    %17 = tpu.matmul %12, %16, %cst_12 {dimension_numbers = #tpu.dot_dimension_numbers<[1], [0], [0], [1], [0, 0, 1, 1], [], []>} : vector<8x128xf32>, vector<128x128xf32>, vector<8x128xf32> -> vector<8x128xf32>
    %18 = tpu.reciprocal %14 {approx = true} : vector<8x1xf32> -> vector<8x1xf32>
    %19 = arith.mulf %14, %18 : vector<8x1xf32>
    %cst_13 = arith.constant 2.000000e+00 : f32
    %20 = vector.broadcast %cst_13 : f32 to vector<8x1xf32>
    %21 = arith.subf %20, %19 : vector<8x1xf32>
    %22 = arith.mulf %18, %21 : vector<8x1xf32>
    %23 = vector.broadcast %22 : vector<8x1xf32> to vector<8x128xf32>
    %24 = arith.mulf %17, %23 : vector<8x128xf32>
    %c0_14 = arith.constant 0 : index
    %c0_15 = arith.constant 0 : index
    %c0_16 = arith.constant 0 : index
    %25 = vector.load %arg7[%c0_14, %c0_15, %c0_16] : memref<1x8x128xf32, #tpu.memory_space<vmem>>, vector<1x8x128xf32>
    %26 = vector.shape_cast %25 : vector<1x8x128xf32> to vector<8x128xf32>
    %27 = vector.shape_cast %24 : vector<8x128xf32> to vector<1x8x128xf32>
    tpu.vector_store %arg7[%c0_14, %c0_15, %c0_16], %27 {strides = array<i32>} : memref<1x8x128xf32, #tpu.memory_space<vmem>>, vector<1x8x128xf32>,
    return
  }
  func.func @transform_0(%arg0: i32, %arg1: i32) -> i32 {
    %c0_i32 = arith.constant 0 : i32
    %c0_i32_0 = arith.constant 0 : i32
    return %c0_i32 : i32
  }
  func.func @transform_1(%arg0: i32, %arg1: i32) -> (i32, i32, i32) {
    %c0_i32 = arith.constant 0 : i32
    %c0_i32_0 = arith.constant 0 : i32
    return %arg0, %arg1, %c0_i32 : i32, i32, i32
  }
  func.func @transform_2(%arg0: i32, %arg1: i32) -> (i32, i32, i32) {
    %c0_i32 = arith.constant 0 : i32
    %c0_i32_0 = arith.constant 0 : i32
    %c0_i32_1 = arith.constant 0 : i32
    return %arg0, %c0_i32, %c0_i32_0 : i32, i32, i32
  }
  func.func @transform_3(%arg0: i32, %arg1: i32) -> (i32, i32, i32) {
    %c0_i32 = arith.constant 0 : i32
    %c0_i32_0 = arith.constant 0 : i32
    %c0_i32_1 = arith.constant 0 : i32
    return %arg0, %c0_i32, %c0_i32_0 : i32, i32, i32
  }
  func.func @transform_4(%arg0: i32, %arg1: i32) -> (i32, i32) {
    %c0_i32 = arith.constant 0 : i32
    %c0_i32_0 = arith.constant 0 : i32
    %c0_i32_1 = arith.constant 0 : i32
    return %c0_i32, %c0_i32_0 : i32, i32
  }
  func.func @transform_5(%arg0: i32, %arg1: i32) -> (i32, i32, i32) {
    %c0_i32 = arith.constant 0 : i32
    %c0_i32_0 = arith.constant 0 : i32
    return %arg0, %arg1, %c0_i32 : i32, i32, i32
  }
}

</mosaic_0001>

<llo_original>
// kernel: tpu_custom_call.1
$region0: #{tpu_custom_call.1}
  #allocation0 [shape = 'u32[]', space=smem, size = 0x4, offset = 0x4, fixed_abs, tag = 'smem constant byte address 0x4 - core index']
  #allocation1 [shape = 'u32[144,128]{1,0:T(1,128)}', space=vmem, size = 0x12000, scoped, tag = 'internal scratch']
  #allocation2 [shape = 'f32[1]{0:T(128)S(6)}', space=smem, size = 0x200, scoped, tag = 'scoped memory for tpu_custom_call.1']
  %s0 = inlined_call_operand.<no memory space> [shape: f32[1], index: 0, kind: input, shape index: {}]
  %s1 = inlined_call_operand.hbm [shape: f32[1,8,128], index: 1, kind: input, shape index: {}]
  %s2 = inlined_call_operand.hbm [shape: f32[1,128,128], index: 2, kind: input, shape index: {}]
  %s3 = inlined_call_operand.hbm [shape: f32[1,128,128], index: 3, kind: input, shape index: {}]
  %s4 = inlined_call_operand.vmem [shape: f32[1,128], index: 4, kind: input, shape index: {}]
  %s5 = inlined_call_operand.hbm [shape: f32[1,8,128], index: 5, kind: output, shape index: {}]
  %s6 = sld [smem:[#allocation0]]
  $region42: #{tpu_custom_call.1} parent=0
    _
  %s8 = ssub.s32 1, %s6
  %s9 = scalar_select 0, %s8, %s6
  %10 = sst [smem:[#allocation2]] %s0
  $region1: #{tpu_custom_call.1} parent=0
    #allocation3 [shape = 'u8[4096]{0}', space=vmem, size = 0x1000, scoped, tag = 'input window, operand 1, single buffered']
    #allocation4 [shape = 's32[1]{0}', space=sflag, size = 0x4, scoped, tag = 'scoped memory for tpu_custom_call.1']
    #allocation5 [shape = 's32[1]{0}', space=sflag, size = 0x4, scoped, tag = 'scoped memory for tpu_custom_call.1']
    #allocation6 [shape = 'u8[65536]{0}', space=vmem, size = 0x10000, scoped, tag = 'input window, operand 2, single buffered']
    #allocation7 [shape = 's32[1]{0}', space=sflag, size = 0x4, scoped, tag = 'scoped memory for tpu_custom_call.1']
    #allocation8 [shape = 'u8[65536]{0}', space=vmem, size = 0x10000, scoped, tag = 'input window, operand 3, single buffered']
    #allocation9 [shape = 'u8[4096]{0}', space=vmem, size = 0x1000, scoped, tag = 'output window, operand 0, single buffered']
    %11 = vsyncpa [#allocation4], 0
    %12 = vsyncpa [#allocation7], 0
    %13 = vsyncpa [#allocation5], 0
    // Predicated region
    $region2: #{tpu_custom_call.1} parent=1 // pred_check
      _
    $region3: #{tpu_custom_call.1} parent=1 // pred_check_branch
      %15 = sbr.rel (0) target = $region5
    $region4: #{tpu_custom_call.1} parent=1 // pred_region
      _
    $region5: #{tpu_custom_call.1} parent=1 // pred_fallthru
      _
    // Predicated region
    $region6: #{tpu_custom_call.1} parent=1 // pred_check
      _
    $region7: #{tpu_custom_call.1} parent=1 // pred_check_branch
      %17 = sbr.rel (0) target = $region9
    $region8: #{tpu_custom_call.1} parent=1 // pred_region
      %s19 = ssub.s32 128, 128
      %20 = vsyncadd [#allocation4], %s19
      %s22 = sshll.u32 [#allocation3], 4
      %s23 = int_to_ptr.vmem [resolvable:$true] %s22
      %25 = dma.hbm_to_vmem [thread:$0]  %s1, 128, %s23, [#allocation4]
    $region9: #{tpu_custom_call.1} parent=1 // pred_fallthru
      _
    // Predicated region
    $region10: #{tpu_custom_call.1} parent=1 // pred_check
      _
    $region11: #{tpu_custom_call.1} parent=1 // pred_check_branch
      %27 = sbr.rel (0) target = $region13
    $region12: #{tpu_custom_call.1} parent=1 // pred_region
      %s29 = ssub.s32 2048, 2048
      %30 = vsyncadd [#allocation7], %s29
      %s31 = sshll.u32 [#allocation6], 4
      %s32 = int_to_ptr.vmem [resolvable:$true] %s31
      %37 = dma.hbm_to_vmem [thread:$0]  %s2, 2048, %s32, [#allocation7], 128, 128, 8
    $region13: #{tpu_custom_call.1} parent=1 // pred_fallthru
      _
    // Predicated region
    $region14: #{tpu_custom_call.1} parent=1 // pred_check
      _
    $region15: #{tpu_custom_call.1} parent=1 // pred_check_branch
      %39 = sbr.rel (0) target = $region17
    $region16: #{tpu_custom_call.1} parent=1 // pred_region
      %s41 = ssub.s32 2048, 2048
      %42 = vsyncadd [#allocation7], %s41
      %s43 = sshll.u32 [#allocation8], 4
      %s44 = int_to_ptr.vmem [resolvable:$true] %s43
      %49 = dma.hbm_to_vmem [thread:$0]  %s3, 2048, %s44, [#allocation7], 128, 128, 8
    $region17: #{tpu_custom_call.1} parent=1 // pred_fallthru
      _
    // Predicated region
    $region18: #{tpu_custom_call.1} parent=1 // pred_check
      _
    $region19: #{tpu_custom_call.1} parent=1 // pred_check_branch
      %51 = sbr.rel (0) target = $region21
    $region20: #{tpu_custom_call.1} parent=1 // pred_region
      _
    $region21: #{tpu_custom_call.1} parent=1 // pred_fallthru
      _
    // Predicated region
    $region22: #{tpu_custom_call.1} parent=1 // pred_check
      _
    $region23: #{tpu_custom_call.1} parent=1 // pred_check_branch
      %53 = sbr.rel (0) target = $region25
    $region24: #{tpu_custom_call.1} parent=1 // pred_region
      %54 = dma.done [#allocation4], 128
    $region25: #{tpu_custom_call.1} parent=1 // pred_fallthru
      _
    // Predicated region
    $region26: #{tpu_custom_call.1} parent=1 // pred_check
      _
    $region27: #{tpu_custom_call.1} parent=1 // pred_check_branch
      %56 = sbr.rel (0) target = $region29
    $region28: #{tpu_custom_call.1} parent=1 // pred_region
      %57 = dma.done [#allocation7], 2048
    $region29: #{tpu_custom_call.1} parent=1 // pred_fallthru
      _
    // Predicated region
    $region30: #{tpu_custom_call.1} parent=1 // pred_check
      _
    $region31: #{tpu_custom_call.1} parent=1 // pred_check_branch
      %59 = sbr.rel (0) target = $region33
    $region32: #{tpu_custom_call.1} parent=1 // pred_region
      %60 = dma.done [#allocation7], 2048
    $region33: #{tpu_custom_call.1} parent=1 // pred_fallthru
      _
    %v61 = vld [vmem:[#allocation3] sm:$0xff]
    %v62 = vld [vmem:[#allocation6] sm:$0xff]
    %v63 = vld [vmem:[#allocation6 + $0x8] sm:$0xff]
    %v64 = vld [vmem:[#allocation6 + $0x10] sm:$0xff]
    %v65 = vld [vmem:[#allocation6 + $0x18] sm:$0xff]
    %v66 = vld [vmem:[#allocation6 + $0x20] sm:$0xff]
    %v67 = vld [vmem:[#allocation6 + $0x28] sm:$0xff]
    %v68 = vld [vmem:[#allocation6 + $0x30] sm:$0xff]
    %v69 = vld [vmem:[#allocation6 + $0x38] sm:$0xff]
    %v70 = vld [vmem:[#allocation6 + $0x40] sm:$0xff]
    %v71 = vld [vmem:[#allocation6 + $0x48] sm:$0xff]
    %v72 = vld [vmem:[#allocation6 + $0x50] sm:$0xff]
    %v73 = vld [vmem:[#allocation6 + $0x58] sm:$0xff]
    %v74 = vld [vmem:[#allocation6 + $0x60] sm:$0xff]
    %v75 = vld [vmem:[#allocation6 + $0x68] sm:$0xff]
    %v76 = vld [vmem:[#allocation6 + $0x70] sm:$0xff]
    %v77 = vld [vmem:[#allocation6 + $0x78] sm:$0xff]
    %v78 = vld [vmem:[%s4] sm:$0x1]
    %v80 = vlaneseq
    %v81 = vshrl.u32 %v80, 7
    %v82 = vsub.s32 0, %v81
    %v83 = vrot.slane %v78, %v82
    %85 = vmatprep.subr.mxu0 0.0
    %86 = vmatpush1.xpose.msra.mxu0 %v62
    %87 = vmatprep.subr.mxu0 0.0
    %88 = vmatpush1.xpose.msra.mxu0 %v63
    %89 = vmatprep.subr.mxu0 0.0
    %90 = vmatpush1.xpose.msra.mxu0 %v64
    %91 = vmatprep.subr.mxu0 0.0
    %92 = vmatpush1.xpose.msra.mxu0 %v65
    %93 = vmatprep.subr.mxu0 0.0
    %94 = vmatpush1.xpose.msra.mxu0 %v66
    %95 = vmatprep.subr.mxu0 0.0
    %96 = vmatpush1.xpose.msra.mxu0 %v67
    %97 = vmatprep.subr.mxu0 0.0
    %98 = vmatpush1.xpose.msra.mxu0 %v68
    %99 = vmatprep.subr.mxu0 0.0
    %100 = vmatpush1.xpose.msra.mxu0 %v69
    %101 = vmatprep.subr.mxu0 0.0
    %102 = vmatpush1.xpose.msra.mxu0 %v70
    %103 = vmatprep.subr.mxu0 0.0
    %104 = vmatpush1.xpose.msra.mxu0 %v71
    %105 = vmatprep.subr.mxu0 0.0
    %106 = vmatpush1.xpose.msra.mxu0 %v72
    %107 = vmatprep.subr.mxu0 0.0
    %108 = vmatpush1.xpose.msra.mxu0 %v73
    %109 = vmatprep.subr.mxu0 0.0
    %110 = vmatpush1.xpose.msra.mxu0 %v74
    %111 = vmatprep.subr.mxu0 0.0
    %112 = vmatpush1.xpose.msra.mxu0 %v75
    %113 = vmatprep.subr.mxu0 0.0
    %114 = vmatpush1.xpose.msra.mxu0 %v76
    %115 = vmatprep.subr.mxu0 0.0
    %116 = vmatpush1.xpose.msra.mxu0 %v77
    %117 = vmatprep.subr.mxu0 0.0
    %118 = vmatpush1.xpose.msra.mxu0 0.0
    %119 = vmatprep.subr.mxu0 0.0
    %120 = vmatpush1.xpose.msra.mxu0 0.0
    %121 = vmatprep.subr.mxu0 0.0
    %122 = vmatpush1.xpose.msra.mxu0 0.0
    %123 = vmatprep.subr.mxu0 0.0
    %124 = vmatpush1.xpose.msra.mxu0 0.0
    %125 = vmatprep.subr.mxu0 0.0
    %126 = vmatpush1.xpose.msra.mxu0 0.0
    %127 = vmatprep.subr.mxu0 0.0
    %128 = vmatpush1.xpose.msra.mxu0 0.0
    %129 = vmatprep.subr.mxu0 0.0
    %130 = vmatpush1.xpose.msra.mxu0 0.0
    %131 = vmatprep.subr.mxu0 0.0
    %132 = vmatpush1.xpose.msra.mxu0 0.0
    %133 = vmatprep.subr.mxu0 0.0
    %134 = vmatpush1.xpose.msra.mxu0 0.0
    %135 = vmatprep.subr.mxu0 0.0
    %136 = vmatpush1.xpose.msra.mxu0 0.0
    %137 = vmatprep.subr.mxu0 0.0
    %138 = vmatpush1.xpose.msra.mxu0 0.0
    %139 = vmatprep.subr.mxu0 0.0
    %140 = vmatpush1.xpose.msra.mxu0 0.0
    %141 = vmatprep.subr.mxu0 0.0
    %142 = vmatpush1.xpose.msra.mxu0 0.0
    %143 = vmatprep.subr.mxu0 0.0
    %144 = vmatpush1.xpose.msra.mxu0 0.0
    %145 = vmatprep.subr.mxu0 0.0
    %146 = vmatpush1.xpose.msra.mxu0 0.0
    %147 = vmatprep.subr.mxu0 0.0
    %148 = vmatpush1.xpose.msra.mxu0 0.0
    %149 = vmatprep.mubr.f32.mxu0 0.0
    %150 = vmatmul.mubr.f32.gmra.mrb[0].mxu0 %v61
    %v151 = vpop.f32.mrb[0].mxu0
    %v152 = vadd.f32 %v83, %v151
    %v153 = vpop.f32.mrb[0].mxu0
    %154 = vdwg.mxu0
    %155 = vmax.xlane.f32.xlu0 %v152
    %v156 = vpop.xlane.xlu0 %155
    %v157 = vsub.f32 %v152, %v156
    %v158 = vmul.f32 %v157, 1.442695
    %v159 = vpow.pop %v158
    %160 = vadd.xlane.f32.xlu0 %v159
    %v161 = vpop.xlane.xlu0 %160
    %v162 = vld [vmem:[#allocation8] sm:$0xff]
    %v163 = vld [vmem:[#allocation8 + $0x8] sm:$0xff]
    %v164 = vld [vmem:[#allocation8 + $0x10] sm:$0xff]
    %v165 = vld [vmem:[#allocation8 + $0x18] sm:$0xff]
    %v166 = vld [vmem:[#allocation8 + $0x20] sm:$0xff]
    %v167 = vld [vmem:[#allocation8 + $0x28] sm:$0xff]
    %v168 = vld [vmem:[#allocation8 + $0x30] sm:$0xff]
    %v169 = vld [vmem:[#allocation8 + $0x38] sm:$0xff]
    %v170 = vld [vmem:[#allocation8 + $0x40] sm:$0xff]
    %v171 = vld [vmem:[#allocation8 + $0x48] sm:$0xff]
    %v172 = vld [vmem:[#allocation8 + $0x50] sm:$0xff]
    %v173 = vld [vmem:[#allocation8 + $0x58] sm:$0xff]
    %v174 = vld [vmem:[#allocation8 + $0x60] sm:$0xff]
    %v175 = vld [vmem:[#allocation8 + $0x68] sm:$0xff]
    %v176 = vld [vmem:[#allocation8 + $0x70] sm:$0xff]
    %v177 = vld [vmem:[#allocation8 + $0x78] sm:$0xff]
    %178 = vmatprep.subr.mxu0 0.0
    %179 = vmatpush1.msra.mxu0 %v162
    %180 = vmatprep.subr.mxu0 0.0
    %181 = vmatpush1.msra.mxu0 %v163
    %182 = vmatprep.subr.mxu0 0.0
    %183 = vmatpush1.msra.mxu0 %v164
    %184 = vmatprep.subr.mxu0 0.0
    %185 = vmatpush1.msra.mxu0 %v165
    %186 = vmatprep.subr.mxu0 0.0
    %187 = vmatpush1.msra.mxu0 %v166
    %188 = vmatprep.subr.mxu0 0.0
    %189 = vmatpush1.msra.mxu0 %v167
    %190 = vmatprep.subr.mxu0 0.0
    %191 = vmatpush1.msra.mxu0 %v168
    %192 = vmatprep.subr.mxu0 0.0
    %193 = vmatpush1.msra.mxu0 %v169
    %194 = vmatprep.subr.mxu0 0.0
    %195 = vmatpush1.msra.mxu0 %v170
    %196 = vmatprep.subr.mxu0 0.0
    %197 = vmatpush1.msra.mxu0 %v171
    %198 = vmatprep.subr.mxu0 0.0
    %199 = vmatpush1.msra.mxu0 %v172
    %200 = vmatprep.subr.mxu0 0.0
    %201 = vmatpush1.msra.mxu0 %v173
    %202 = vmatprep.subr.mxu0 0.0
    %203 = vmatpush1.msra.mxu0 %v174
    %204 = vmatprep.subr.mxu0 0.0
    %205 = vmatpush1.msra.mxu0 %v175
    %206 = vmatprep.subr.mxu0 0.0
    %207 = vmatpush1.msra.mxu0 %v176
    %208 = vmatprep.subr.mxu0 0.0
    %209 = vmatpush1.msra.mxu0 %v177
    %210 = vmatprep.subr.mxu0 0.0
    %211 = vmatpush1.msra.mxu0 0.0
    %212 = vmatprep.subr.mxu0 0.0
    %213 = vmatpush1.msra.mxu0 0.0
    %214 = vmatprep.subr.mxu0 0.0
    %215 = vmatpush1.msra.mxu0 0.0
    %216 = vmatprep.subr.mxu0 0.0
    %217 = vmatpush1.msra.mxu0 0.0
    %218 = vmatprep.subr.mxu0 0.0
    %219 = vmatpush1.msra.mxu0 0.0
    %220 = vmatprep.subr.mxu0 0.0
    %221 = vmatpush1.msra.mxu0 0.0
    %222 = vmatprep.subr.mxu0 0.0
    %223 = vmatpush1.msra.mxu0 0.0
    %224 = vmatprep.subr.mxu0 0.0
    %225 = vmatpush1.msra.mxu0 0.0
    %226 = vmatprep.subr.mxu0 0.0
    %227 = vmatpush1.msra.mxu0 0.0
    %228 = vmatprep.subr.mxu0 0.0
    %229 = vmatpush1.msra.mxu0 0.0
    %230 = vmatprep.subr.mxu0 0.0
    %231 = vmatpush1.msra.mxu0 0.0
    %232 = vmatprep.subr.mxu0 0.0
    %233 = vmatpush1.msra.mxu0 0.0
    %234 = vmatprep.subr.mxu0 0.0
    %235 = vmatpush1.msra.mxu0 0.0
    %236 = vmatprep.subr.mxu0 0.0
    %237 = vmatpush1.msra.mxu0 0.0
    %238 = vmatprep.subr.mxu0 0.0
    %239 = vmatpush1.msra.mxu0 0.0
    %240 = vmatprep.subr.mxu0 0.0
    %241 = vmatpush1.msra.mxu0 0.0
    %242 = vmatprep.mubr.f32.mxu0 0.0
    %243 = vmatmul.mubr.f32.gmra.mrb[0].mxu0 %v159
    %v244 = vpop.f32.mrb[0].mxu0
    %v245 = vadd.f32 0.0, %v244
    %v246 = vpop.f32.mrb[0].mxu0
    %247 = vdwg.mxu0
    %v248 = vrcp.pop %v161
    %v249 = vmul.f32 %v161, %v248
    %v250 = vsub.f32 2.0, %v249
    %v251 = vmul.f32 %v248, %v250
    %v252 = vmul.f32 %v245, %v251
    %253 = vst [vmem:[#allocation9] sm:$0xff] %v252
    // Predicated region
    $region34: #{tpu_custom_call.1} parent=1 // pred_check
      _
    $region35: #{tpu_custom_call.1} parent=1 // pred_check_branch
      %255 = sbr.rel (0) target = $region37
    $region36: #{tpu_custom_call.1} parent=1 // pred_region
      %s257 = ssub.s32 128, 128
      %258 = vsyncadd [#allocation5], %s257
      %s260 = sshll.u32 [#allocation9], 4
      %s261 = int_to_ptr.vmem [resolvable:$true] %s260
      %263 = dma.vmem_to_hbm [thread:$0]  %s261, 128, %s5, [#allocation5]
    $region37: #{tpu_custom_call.1} parent=1 // pred_fallthru
      _
    // Predicated region
    $region38: #{tpu_custom_call.1} parent=1 // pred_check
      _
    $region39: #{tpu_custom_call.1} parent=1 // pred_check_branch
      %265 = sbr.rel (0) target = $region41
    $region40: #{tpu_custom_call.1} parent=1 // pred_region
      %266 = dma.done [#allocation5], 128
    $region41: #{tpu_custom_call.1} parent=1 // pred_fallthru
      _
    %267 = vsyncpa [#allocation4], 1
    %268 = vsyncpa [#allocation7], 1
    %269 = vsyncpa [#allocation5], 1

</llo_original>
